<compile_context>
chip_gen: v7x
topology: tpu7x:2x2x1
jax: 0.10.0
libtpu: 0.0.40
codegen_flags: <defaults>
</compile_context>

<pallas_src>
import jax
import jax.numpy as jnp
import numpy as np
from jax.experimental import pallas as pl
from jax.experimental.pallas import tpu as pltpu

# TODO(synk): the HuggingFace tokenizer and pretrained T5EncoderModel forward
# are external pretrained components and are not reproduced here; synthetic
# 16-bit embeddings and a synthetic attention mask stand in for their outputs.
# (The real model runs in fp16 on CUDA; bf16 is the native 16-bit format on
# TPU, so the synthetic encoder output is bf16.)


def proj_mask_kernel(x_ref, w_ref, b_ref, m_ref, o_ref):
    # x_ref: (tm, D) bf16, w_ref: (D, tn) bf16, b_ref: (1, tn) f32,
    # m_ref: (tm, 1) i32, o_ref: (tm, tn) out dtype
    acc = jnp.dot(x_ref[...], w_ref[...],
                  preferred_element_type=jnp.float32)      # single bf16 MXU pass
    mask = m_ref[...].astype(jnp.float32)                  # 0/1 mask on the VPU
    o_ref[...] = ((acc + b_ref[...]) * mask).astype(o_ref.dtype)


def t5_conditioner_forward(embeddings_16, attention_mask, weight_t, bias,
                           *, tm=256, tn=None, out_dtype=jnp.float32):
    """Mirrors:
         emb = proj_out(embeddings.float())
         emb = emb * attention_mask.unsqueeze(-1).float()
         return emb, attention_mask

    embeddings_16 : (B, L, D) 16-bit float (encoder last_hidden_state)
    attention_mask: (B, L) bool
    weight_t      : (D, N) nn.Linear weight, transposed; ideally stored bf16
    bias          : (N,)   f32
    tm            : row tile (clamped to M).  256 keeps x/out tiles small and
                    lets writeback of tile i-1 overlap compute of tile i.
    tn            : output-column tile.  Default N (single weight block; best
                    on v5e/v6e).  Use N // 2 on v7x so the "parallel" N axis
                    shards per-TC weight DMA across both TensorCores.
    """
    B, L, D = embeddings_16.shape
    N = weight_t.shape[1]
    M = B * L
    if tn is None:
        tn = N
    tm = min(tm, M)
    assert N % tn == 0 and tn % 128 == 0
    assert M % tm == 0
    assert tm == M or tm % 16 == 0        # bf16 x block: sublane-pack multiple
    assert D % 128 == 0

    # Glue (free reshapes / tiny casts only — no f32 activation materialization):
    x = embeddings_16.reshape(M, D)
    if x.dtype != jnp.bfloat16:
        x = x.astype(jnp.bfloat16)
    # Weight should be stored bf16 by the caller; cast here only as a fallback.
    w16 = weight_t if weight_t.dtype == jnp.bfloat16 else weight_t.astype(jnp.bfloat16)
    m = attention_mask.reshape(M, 1).astype(jnp.int32)   # tiny, cast in-kernel
    b = bias.reshape(1, N).astype(jnp.float32)

    out_itemsize = np.dtype(out_dtype).itemsize
    cost = pl.CostEstimate(
        flops=2 * M * D * N,
        transcendentals=0,
        bytes_accessed=(D * N * 2            # bf16 weight (once per N tile)
                        + M * D * 2          # bf16 activations
                        + M * 4 + N * 4      # mask + bias
                        + M * N * out_itemsize))

    # Grid: j over N tiles (outer), i over M tiles (inner, fastest) — the
    # weight/bias block index is constant across the inner i loop, so the
    # weight is DMA'd once per N tile and stays VMEM-resident.
    grid = (N // tn, M // tm)
    out = pl.pallas_call(
        proj_mask_kernel,
        out_shape=jax.ShapeDtypeStruct((M, N), out_dtype),
        grid_spec=pltpu.PrefetchScalarGridSpec(
            num_scalar_prefetch=0,
            grid=grid,
            in_specs=[
                pl.BlockSpec((tm, D), lambda j, i: (i, 0)),   # activations bf16
                pl.BlockSpec((D, tn), lambda j, i: (0, j)),   # weight bf16 (resident over i)
                pl.BlockSpec((1, tn), lambda j, i: (0, j)),   # bias f32
                pl.BlockSpec((tm, 1), lambda j, i: (i, 0)),   # mask int32
            ],
            out_specs=pl.BlockSpec((tm, tn), lambda j, i: (i, j)),
        ),
        compiler_params=pltpu.CompilerParams(
            dimension_semantics=("parallel", "parallel"),
            vmem_limit_bytes=32 * 1024 * 1024),
        cost_estimate=cost,
    )(x, w16, b, m)

    embeddings_out = out.reshape(B, L, N)
    return embeddings_out, attention_mask


if __name__ == "__main__":
    # Module config: t5-base => dim = 768; pick output_dim != dim so proj_out
    # is a real nn.Linear (not Identity).  Small batch / sequence.
    D = 768          # T5_MODEL_DIMS['t5-base']
    N = 512          # output_dim
    B, L = 2, 16     # batch, (truncated) sequence length

    key = jax.random.PRNGKey(0)
    k_emb, k_w, k_b = jax.random.split(key, 3)

    # Synthetic T5 last_hidden_state in 16-bit float (see TODO above).
    embeddings_16 = jax.random.normal(k_emb, (B, L, D), dtype=jnp.float32)
    embeddings_16 = embeddings_16.astype(jnp.bfloat16)

    # Synthetic attention mask (padding='max_length' style: valid prefix).
    lengths = jnp.array([12, 7], dtype=jnp.int32)
    attention_mask = (jnp.arange(L)[None, :] < lengths[:, None])  # (B, L) bool

    # Deterministic nn.Linear(768, 512) init (uniform(-1/sqrt(D), 1/sqrt(D))).
    bound = 1.0 / np.sqrt(D)
    weight = jax.random.uniform(k_w, (N, D), jnp.float32, -bound, bound)
    bias = jax.random.uniform(k_b, (N,), jnp.float32, -bound, bound)
    weight_t = weight.T                                   # (D, N)
    weight_t_bf16 = weight_t.astype(jnp.bfloat16)         # stored bf16 once

    emb_out, mask_out = t5_conditioner_forward(
        embeddings_16, attention_mask, weight_t_bf16, bias)
    emb_out = jax.block_until_ready(emb_out)

    # Reference check against a true-f32 projection (numpy), with tolerance
    # relaxed to bf16-weight precision (~1e-2 relative), per perf review.
    x32 = np.asarray(embeddings_16.astype(jnp.float32)).reshape(B * L, D)
    w32 = np.asarray(weight_t, dtype=np.float32)
    ref = x32 @ w32 + np.asarray(bias, dtype=np.float32)[None, :]
    ref = ref.reshape(B, L, N) * np.asarray(attention_mask, np.float32)[..., None]
    np.testing.assert_allclose(np.asarray(emb_out), ref, rtol=1e-2, atol=1e-2)
    assert mask_out.dtype == jnp.bool_ and mask_out.shape == (B, L)

    print("KERNEL_OK")
</pallas_src>

<mosaic_0001>
module attributes {stable_mosaic.version = 11 : i64} {
  func.func @proj_mask_kernel(%arg0: i32, %arg1: i32, %arg2: memref<32x768xbf16, #tpu.memory_space<vmem>>, %arg3: memref<768x512xbf16, #tpu.memory_space<vmem>>, %arg4: memref<1x512xf32, #tpu.memory_space<vmem>>, %arg5: memref<32x1xi32, #tpu.memory_space<vmem>>, %arg6: memref<32x512xf32, #tpu.memory_space<vmem>>) attributes {dimension_semantics = [#tpu.dimension_semantics<parallel>, #tpu.dimension_semantics<parallel>], iteration_bounds = array<i64: 1, 1>, scalar_prefetch = 0 : i64, scratch_operands = 0 : i64, tpu.core_type = #tpu.core_type<tc>, window_params = [{transform_indices = @transform_0, window_bounds = array<i64: 32, 768>}, {transform_indices = @transform_1, window_bounds = array<i64: 768, 512>}, {transform_indices = @transform_2, window_bounds = array<i64: 1, 512>}, {transform_indices = @transform_3, window_bounds = array<i64: 32, 1>}, {transform_indices = @transform_4, window_bounds = array<i64: 32, 512>}]} {
    %c0 = arith.constant 0 : index
    %c0_0 = arith.constant 0 : index
    %0 = vector.load %arg2[%c0, %c0_0] : memref<32x768xbf16, #tpu.memory_space<vmem>>, vector<32x768xbf16>
    %c0_1 = arith.constant 0 : index
    %c0_2 = arith.constant 0 : index
    %1 = vector.load %arg3[%c0_1, %c0_2] : memref<768x512xbf16, #tpu.memory_space<vmem>>, vector<768x512xbf16>
    %cst = arith.constant dense<0.000000e+00> : vector<32x512xf32>
    %2 = tpu.matmul %0, %1, %cst {dimension_numbers = #tpu.dot_dimension_numbers<[1], [0], [0], [1], [0, 0, 1, 1], [], []>} : vector<32x768xbf16>, vector<768x512xbf16>, vector<32x512xf32> -> vector<32x512xf32>
    %c0_3 = arith.constant 0 : index
    %c0_4 = arith.constant 0 : index
    %3 = vector.load %arg5[%c0_3, %c0_4] : memref<32x1xi32, #tpu.memory_space<vmem>>, vector<32x1xi32>
    %4 = arith.sitofp %3 : vector<32x1xi32> to vector<32x1xf32>
    %c0_5 = arith.constant 0 : index
    %c0_6 = arith.constant 0 : index
    %5 = vector.load %arg4[%c0_5, %c0_6] : memref<1x512xf32, #tpu.memory_space<vmem>>, vector<1x512xf32>
    %6 = vector.broadcast %5 : vector<1x512xf32> to vector<32x512xf32>
    %7 = arith.addf %2, %6 : vector<32x512xf32>
    %8 = vector.broadcast %4 : vector<32x1xf32> to vector<32x512xf32>
    %9 = arith.mulf %7, %8 : vector<32x512xf32>
    %c0_7 = arith.constant 0 : index
    %c0_8 = arith.constant 0 : index
    %10 = vector.load %arg6[%c0_7, %c0_8] : memref<32x512xf32, #tpu.memory_space<vmem>>, vector<32x512xf32>
    tpu.vector_store %arg6[%c0_7, %c0_8], %9 {strides = array<i32>} : memref<32x512xf32, #tpu.memory_space<vmem>>, vector<32x512xf32>,
    return
  }
  func.func @transform_0(%arg0: i32, %arg1: i32) -> (i32, i32) {
    %c0_i32 = arith.constant 0 : i32
    %c0_i32_0 = arith.constant 0 : i32
    return %arg1, %c0_i32 : i32, i32
  }
  func.func @transform_1(%arg0: i32, %arg1: i32) -> (i32, i32) {
    %c0_i32 = arith.constant 0 : i32
    %c0_i32_0 = arith.constant 0 : i32
    return %c0_i32, %arg0 : i32, i32
  }
  func.func @transform_2(%arg0: i32, %arg1: i32) -> (i32, i32) {
    %c0_i32 = arith.constant 0 : i32
    %c0_i32_0 = arith.constant 0 : i32
    return %c0_i32, %arg0 : i32, i32
  }
  func.func @transform_3(%arg0: i32, %arg1: i32) -> (i32, i32) {
    %c0_i32 = arith.constant 0 : i32
    %c0_i32_0 = arith.constant 0 : i32
    return %arg1, %c0_i32 : i32, i32
  }
  func.func @transform_4(%arg0: i32, %arg1: i32) -> (i32, i32) {
    %c0_i32 = arith.constant 0 : i32
    return %arg1, %arg0 : i32, i32
  }
}

</mosaic_0001>

<llo_original>
// kernel: tpu_custom_call.1
$region0: #{tpu_custom_call.1}
  #allocation0 [shape = 'u32[]', space=smem, size = 0x4, offset = 0x4, fixed_abs, tag = 'smem constant byte address 0x4 - core index']
  #allocation1 [shape = 'u32[144,128]{1,0:T(1,128)}', space=vmem, size = 0x12000, scoped, tag = 'internal scratch']
  %s0 = inlined_call_operand.hbm [shape: bf16[32,768], index: 0, kind: input, shape index: {}]
  %s1 = inlined_call_operand.hbm [shape: bf16[768,512], index: 1, kind: input, shape index: {}]
  %s2 = inlined_call_operand.vmem [shape: f32[1,512], index: 2, kind: input, shape index: {}]
  %s3 = inlined_call_operand.vmem [shape: s32[32,1], index: 3, kind: input, shape index: {}]
  %s4 = inlined_call_operand.hbm [shape: f32[32,512], index: 4, kind: output, shape index: {}]
  %s5 = sld [smem:[#allocation0]]
  $region34: #{tpu_custom_call.1} parent=0
    _
  %s7 = ssub.s32 1, %s5
  %s8 = scalar_select 0, %s7, %s5
  $region1: #{tpu_custom_call.1} parent=0
    #allocation2 [shape = 'u8[49152]{0}', space=vmem, size = 0xc000, scoped, tag = 'input window, operand 0, single buffered']
    #allocation3 [shape = 's32[1]{0}', space=sflag, size = 0x4, scoped, tag = 'scoped memory for tpu_custom_call.1']
    #allocation4 [shape = 's32[1]{0}', space=sflag, size = 0x4, scoped, tag = 'scoped memory for tpu_custom_call.1']
    #allocation5 [shape = 'u8[786432]{0}', space=vmem, size = 0xc0000, scoped, tag = 'input window, operand 1, single buffered']
    #allocation6 [shape = 's32[1]{0}', space=sflag, size = 0x4, scoped, tag = 'scoped memory for tpu_custom_call.1']
    #allocation7 [shape = 'u8[65536]{0}', space=vmem, size = 0x10000, scoped, tag = 'output window, operand 0, single buffered']
    %9 = vsyncpa [#allocation3], 0
    %10 = vsyncpa [#allocation6], 0
    %11 = vsyncpa [#allocation4], 0
    // Predicated region
    $region2: #{tpu_custom_call.1} parent=1 // pred_check
      _
    $region3: #{tpu_custom_call.1} parent=1 // pred_check_branch
      %13 = sbr.rel (0) target = $region5
    $region4: #{tpu_custom_call.1} parent=1 // pred_region
      %s15 = ssub.s32 1536, 1536
      %16 = vsyncadd [#allocation3], %s15
      %s17 = sshll.u32 [#allocation2], 4
      %s18 = int_to_ptr.vmem [resolvable:$true] %s17
      %23 = dma.hbm_to_vmem [thread:$0]  %s0, 1536, %s18, [#allocation3], 384, 384, 24
    $region5: #{tpu_custom_call.1} parent=1 // pred_fallthru
      _
    // Predicated region
    $region6: #{tpu_custom_call.1} parent=1 // pred_check
      _
    $region7: #{tpu_custom_call.1} parent=1 // pred_check_branch
      %25 = sbr.rel (0) target = $region9
    $region8: #{tpu_custom_call.1} parent=1 // pred_region
      %s27 = ssub.s32 24576, 24576
      %28 = vsyncadd [#allocation6], %s27
      %s29 = sshll.u32 [#allocation5], 4
      %s30 = int_to_ptr.vmem [resolvable:$true] %s29
      %35 = dma.hbm_to_vmem [thread:$0]  %s1, 24576, %s30, [#allocation6], 256, 256, 16
    $region9: #{tpu_custom_call.1} parent=1 // pred_fallthru
      _
    // Predicated region
    $region10: #{tpu_custom_call.1} parent=1 // pred_check
      _
    $region11: #{tpu_custom_call.1} parent=1 // pred_check_branch
      %37 = sbr.rel (0) target = $region13
    $region12: #{tpu_custom_call.1} parent=1 // pred_region
      _
    $region13: #{tpu_custom_call.1} parent=1 // pred_fallthru
      _
    // Predicated region
    $region14: #{tpu_custom_call.1} parent=1 // pred_check
      _
    $region15: #{tpu_custom_call.1} parent=1 // pred_check_branch
      %39 = sbr.rel (0) target = $region17
    $region16: #{tpu_custom_call.1} parent=1 // pred_region
      _
    $region17: #{tpu_custom_call.1} parent=1 // pred_fallthru
      _
    // Predicated region
    $region18: #{tpu_custom_call.1} parent=1 // pred_check
      _
    $region19: #{tpu_custom_call.1} parent=1 // pred_check_branch
      %41 = sbr.rel (0) target = $region21
    $region20: #{tpu_custom_call.1} parent=1 // pred_region
      %42 = dma.done [#allocation3], 1536
    $region21: #{tpu_custom_call.1} parent=1 // pred_fallthru
      _
    // Predicated region
    $region22: #{tpu_custom_call.1} parent=1 // pred_check
      _
    $region23: #{tpu_custom_call.1} parent=1 // pred_check_branch
      %44 = sbr.rel (0) target = $region25
    $region24: #{tpu_custom_call.1} parent=1 // pred_region
      %45 = dma.done [#allocation6], 24576
    $region25: #{tpu_custom_call.1} parent=1 // pred_fallthru
      _
    %v46 = vld [vmem:[#allocation2] sm:$0xff]
    %v47 = vld [vmem:[#allocation2 + $0x8] sm:$0xff]
    %v48 = vld [vmem:[#allocation2 + $0x10] sm:$0xff]
    %v49 = vld [vmem:[#allocation2 + $0x18] sm:$0xff]
    %v50 = vld [vmem:[#allocation2 + $0x20] sm:$0xff]
    %v51 = vld [vmem:[#allocation2 + $0x28] sm:$0xff]
    %v52 = vld [vmem:[#allocation2 + $0x30] sm:$0xff]
    %v53 = vld [vmem:[#allocation2 + $0x38] sm:$0xff]
    %v54 = vld [vmem:[#allocation2 + $0x40] sm:$0xff]
    %v55 = vld [vmem:[#allocation2 + $0x48] sm:$0xff]
    %v56 = vld [vmem:[#allocation2 + $0x50] sm:$0xff]
    %v57 = vld [vmem:[#allocation2 + $0x58] sm:$0xff]
    %v58 = vld [vmem:[#allocation5] sm:$0xff]
    %v59 = vld [vmem:[#allocation5 + $0x8] sm:$0xff]
    %v60 = vld [vmem:[#allocation5 + $0x10] sm:$0xff]
    %v61 = vld [vmem:[#allocation5 + $0x18] sm:$0xff]
    %v62 = vld [vmem:[#allocation5 + $0x20] sm:$0xff]
    %v63 = vld [vmem:[#allocation5 + $0x28] sm:$0xff]
    %v64 = vld [vmem:[#allocation5 + $0x30] sm:$0xff]
    %v65 = vld [vmem:[#allocation5 + $0x38] sm:$0xff]
    %v66 = vld [vmem:[#allocation5 + $0x40] sm:$0xff]
    %v67 = vld [vmem:[#allocation5 + $0x48] sm:$0xff]
    %v68 = vld [vmem:[#allocation5 + $0x50] sm:$0xff]
    %v69 = vld [vmem:[#allocation5 + $0x58] sm:$0xff]
    %v70 = vld [vmem:[#allocation5 + $0x60] sm:$0xff]
    %v71 = vld [vmem:[#allocation5 + $0x68] sm:$0xff]
    %v72 = vld [vmem:[#allocation5 + $0x70] sm:$0xff]
    %v73 = vld [vmem:[#allocation5 + $0x78] sm:$0xff]
    %v74 = vld [vmem:[#allocation5 + $0x80] sm:$0xff]
    %v75 = vld [vmem:[#allocation5 + $0x88] sm:$0xff]
    %v76 = vld [vmem:[#allocation5 + $0x90] sm:$0xff]
    %v77 = vld [vmem:[#allocation5 + $0x98] sm:$0xff]
    %v78 = vld [vmem:[#allocation5 + $0xa0] sm:$0xff]
    %v79 = vld [vmem:[#allocation5 + $0xa8] sm:$0xff]
    %v80 = vld [vmem:[#allocation5 + $0xb0] sm:$0xff]
    %v81 = vld [vmem:[#allocation5 + $0xb8] sm:$0xff]
    %v82 = vld [vmem:[#allocation5 + $0xc0] sm:$0xff]
    %v83 = vld [vmem:[#allocation5 + $0xc8] sm:$0xff]
    %v84 = vld [vmem:[#allocation5 + $0xd0] sm:$0xff]
    %v85 = vld [vmem:[#allocation5 + $0xd8] sm:$0xff]
    %v86 = vld [vmem:[#allocation5 + $0xe0] sm:$0xff]
    %v87 = vld [vmem:[#allocation5 + $0xe8] sm:$0xff]
    %v88 = vld [vmem:[#allocation5 + $0xf0] sm:$0xff]
    %v89 = vld [vmem:[#allocation5 + $0xf8] sm:$0xff]
    %v90 = vld [vmem:[#allocation5 + $0x100] sm:$0xff]
    %v91 = vld [vmem:[#allocation5 + $0x108] sm:$0xff]
    %v92 = vld [vmem:[#allocation5 + $0x110] sm:$0xff]
    %v93 = vld [vmem:[#allocation5 + $0x118] sm:$0xff]
    %v94 = vld [vmem:[#allocation5 + $0x120] sm:$0xff]
    %v95 = vld [vmem:[#allocation5 + $0x128] sm:$0xff]
    %v96 = vld [vmem:[#allocation5 + $0x130] sm:$0xff]
    %v97 = vld [vmem:[#allocation5 + $0x138] sm:$0xff]
    %v98 = vld [vmem:[#allocation5 + $0x140] sm:$0xff]
    %v99 = vld [vmem:[#allocation5 + $0x148] sm:$0xff]
    %v100 = vld [vmem:[#allocation5 + $0x150] sm:$0xff]
    %v101 = vld [vmem:[#allocation5 + $0x158] sm:$0xff]
    %v102 = vld [vmem:[#allocation5 + $0x160] sm:$0xff]
    %v103 = vld [vmem:[#allocation5 + $0x168] sm:$0xff]
    %v104 = vld [vmem:[#allocation5 + $0x170] sm:$0xff]
    %v105 = vld [vmem:[#allocation5 + $0x178] sm:$0xff]
    %v106 = vld [vmem:[#allocation5 + $0x180] sm:$0xff]
    %v107 = vld [vmem:[#allocation5 + $0x188] sm:$0xff]
    %v108 = vld [vmem:[#allocation5 + $0x190] sm:$0xff]
    %v109 = vld [vmem:[#allocation5 + $0x198] sm:$0xff]
    %v110 = vld [vmem:[#allocation5 + $0x1a0] sm:$0xff]
    %v111 = vld [vmem:[#allocation5 + $0x1a8] sm:$0xff]
    %v112 = vld [vmem:[#allocation5 + $0x1b0] sm:$0xff]
    %v113 = vld [vmem:[#allocation5 + $0x1b8] sm:$0xff]
    %v114 = vld [vmem:[#allocation5 + $0x1c0] sm:$0xff]
    %v115 = vld [vmem:[#allocation5 + $0x1c8] sm:$0xff]
    %v116 = vld [vmem:[#allocation5 + $0x1d0] sm:$0xff]
    %v117 = vld [vmem:[#allocation5 + $0x1d8] sm:$0xff]
    %v118 = vld [vmem:[#allocation5 + $0x1e0] sm:$0xff]
    %v119 = vld [vmem:[#allocation5 + $0x1e8] sm:$0xff]
    %v120 = vld [vmem:[#allocation5 + $0x1f0] sm:$0xff]
    %v121 = vld [vmem:[#allocation5 + $0x1f8] sm:$0xff]
    %v122 = vld [vmem:[#allocation5 + $0x200] sm:$0xff]
    %v123 = vld [vmem:[#allocation5 + $0x208] sm:$0xff]
    %v124 = vld [vmem:[#allocation5 + $0x210] sm:$0xff]
    %v125 = vld [vmem:[#allocation5 + $0x218] sm:$0xff]
    %v126 = vld [vmem:[#allocation5 + $0x220] sm:$0xff]
    %v127 = vld [vmem:[#allocation5 + $0x228] sm:$0xff]
    %v128 = vld [vmem:[#allocation5 + $0x230] sm:$0xff]
    %v129 = vld [vmem:[#allocation5 + $0x238] sm:$0xff]
    %v130 = vld [vmem:[#allocation5 + $0x240] sm:$0xff]
    %v131 = vld [vmem:[#allocation5 + $0x248] sm:$0xff]
    %v132 = vld [vmem:[#allocation5 + $0x250] sm:$0xff]
    %v133 = vld [vmem:[#allocation5 + $0x258] sm:$0xff]
    %v134 = vld [vmem:[#allocation5 + $0x260] sm:$0xff]
    %v135 = vld [vmem:[#allocation5 + $0x268] sm:$0xff]
    %v136 = vld [vmem:[#allocation5 + $0x270] sm:$0xff]
    %v137 = vld [vmem:[#allocation5 + $0x278] sm:$0xff]
    %v138 = vld [vmem:[#allocation5 + $0x280] sm:$0xff]
    %v139 = vld [vmem:[#allocation5 + $0x288] sm:$0xff]
    %v140 = vld [vmem:[#allocation5 + $0x290] sm:$0xff]
    %v141 = vld [vmem:[#allocation5 + $0x298] sm:$0xff]
    %v142 = vld [vmem:[#allocation5 + $0x2a0] sm:$0xff]
    %v143 = vld [vmem:[#allocation5 + $0x2a8] sm:$0xff]
    %v144 = vld [vmem:[#allocation5 + $0x2b0] sm:$0xff]
    %v145 = vld [vmem:[#allocation5 + $0x2b8] sm:$0xff]
    %v146 = vld [vmem:[#allocation5 + $0x2c0] sm:$0xff]
    %v147 = vld [vmem:[#allocation5 + $0x2c8] sm:$0xff]
    %v148 = vld [vmem:[#allocation5 + $0x2d0] sm:$0xff]
    %v149 = vld [vmem:[#allocation5 + $0x2d8] sm:$0xff]
    %v150 = vld [vmem:[#allocation5 + $0x2e0] sm:$0xff]
    %v151 = vld [vmem:[#allocation5 + $0x2e8] sm:$0xff]
    %v152 = vld [vmem:[#allocation5 + $0x2f0] sm:$0xff]
    %v153 = vld [vmem:[#allocation5 + $0x2f8] sm:$0xff]
    %v154 = vld [vmem:[#allocation5 + $0x300] sm:$0xff]
    %v155 = vld [vmem:[#allocation5 + $0x308] sm:$0xff]
    %v156 = vld [vmem:[#allocation5 + $0x310] sm:$0xff]
    %v157 = vld [vmem:[#allocation5 + $0x318] sm:$0xff]
    %v158 = vld [vmem:[#allocation5 + $0x320] sm:$0xff]
    %v159 = vld [vmem:[#allocation5 + $0x328] sm:$0xff]
    %v160 = vld [vmem:[#allocation5 + $0x330] sm:$0xff]
    %v161 = vld [vmem:[#allocation5 + $0x338] sm:$0xff]
    %v162 = vld [vmem:[#allocation5 + $0x340] sm:$0xff]
    %v163 = vld [vmem:[#allocation5 + $0x348] sm:$0xff]
    %v164 = vld [vmem:[#allocation5 + $0x350] sm:$0xff]
    %v165 = vld [vmem:[#allocation5 + $0x358] sm:$0xff]
    %v166 = vld [vmem:[#allocation5 + $0x360] sm:$0xff]
    %v167 = vld [vmem:[#allocation5 + $0x368] sm:$0xff]
    %v168 = vld [vmem:[#allocation5 + $0x370] sm:$0xff]
    %v169 = vld [vmem:[#allocation5 + $0x378] sm:$0xff]
    %v170 = vld [vmem:[#allocation5 + $0x380] sm:$0xff]
    %v171 = vld [vmem:[#allocation5 + $0x388] sm:$0xff]
    %v172 = vld [vmem:[#allocation5 + $0x390] sm:$0xff]
    %v173 = vld [vmem:[#allocation5 + $0x398] sm:$0xff]
    %v174 = vld [vmem:[#allocation5 + $0x3a0] sm:$0xff]
    %v175 = vld [vmem:[#allocation5 + $0x3a8] sm:$0xff]
    %v176 = vld [vmem:[#allocation5 + $0x3b0] sm:$0xff]
    %v177 = vld [vmem:[#allocation5 + $0x3b8] sm:$0xff]
    %v178 = vld [vmem:[#allocation5 + $0x3c0] sm:$0xff]
    %v179 = vld [vmem:[#allocation5 + $0x3c8] sm:$0xff]
    %v180 = vld [vmem:[#allocation5 + $0x3d0] sm:$0xff]
    %v181 = vld [vmem:[#allocation5 + $0x3d8] sm:$0xff]
    %v182 = vld [vmem:[#allocation5 + $0x3e0] sm:$0xff]
    %v183 = vld [vmem:[#allocation5 + $0x3e8] sm:$0xff]
    %v184 = vld [vmem:[#allocation5 + $0x3f0] sm:$0xff]
    %v185 = vld [vmem:[#allocation5 + $0x3f8] sm:$0xff]
    %v186 = vld [vmem:[#allocation5 + $0x400] sm:$0xff]
    %v187 = vld [vmem:[#allocation5 + $0x408] sm:$0xff]
    %v188 = vld [vmem:[#allocation5 + $0x410] sm:$0xff]
    %v189 = vld [vmem:[#allocation5 + $0x418] sm:$0xff]
    %v190 = vld [vmem:[#allocation5 + $0x420] sm:$0xff]
    %v191 = vld [vmem:[#allocation5 + $0x428] sm:$0xff]
    %v192 = vld [vmem:[#allocation5 + $0x430] sm:$0xff]
    %v193 = vld [vmem:[#allocation5 + $0x438] sm:$0xff]
    %v194 = vld [vmem:[#allocation5 + $0x440] sm:$0xff]
    %v195 = vld [vmem:[#allocation5 + $0x448] sm:$0xff]
    %v196 = vld [vmem:[#allocation5 + $0x450] sm:$0xff]
    %v197 = vld [vmem:[#allocation5 + $0x458] sm:$0xff]
    %v198 = vld [vmem:[#allocation5 + $0x460] sm:$0xff]
    %v199 = vld [vmem:[#allocation5 + $0x468] sm:$0xff]
    %v200 = vld [vmem:[#allocation5 + $0x470] sm:$0xff]
    %v201 = vld [vmem:[#allocation5 + $0x478] sm:$0xff]
    %v202 = vld [vmem:[#allocation5 + $0x480] sm:$0xff]
    %v203 = vld [vmem:[#allocation5 + $0x488] sm:$0xff]
    %v204 = vld [vmem:[#allocation5 + $0x490] sm:$0xff]
    %v205 = vld [vmem:[#allocation5 + $0x498] sm:$0xff]
    %v206 = vld [vmem:[#allocation5 + $0x4a0] sm:$0xff]
    %v207 = vld [vmem:[#allocation5 + $0x4a8] sm:$0xff]
    %v208 = vld [vmem:[#allocation5 + $0x4b0] sm:$0xff]
    %v209 = vld [vmem:[#allocation5 + $0x4b8] sm:$0xff]
    %v210 = vld [vmem:[#allocation5 + $0x4c0] sm:$0xff]
    %v211 = vld [vmem:[#allocation5 + $0x4c8] sm:$0xff]
    %v212 = vld [vmem:[#allocation5 + $0x4d0] sm:$0xff]
    %v213 = vld [vmem:[#allocation5 + $0x4d8] sm:$0xff]
    %v214 = vld [vmem:[#allocation5 + $0x4e0] sm:$0xff]
    %v215 = vld [vmem:[#allocation5 + $0x4e8] sm:$0xff]
    %v216 = vld [vmem:[#allocation5 + $0x4f0] sm:$0xff]
    %v217 = vld [vmem:[#allocation5 + $0x4f8] sm:$0xff]
    %v218 = vld [vmem:[#allocation5 + $0x500] sm:$0xff]
    %v219 = vld [vmem:[#allocation5 + $0x508] sm:$0xff]
    %v220 = vld [vmem:[#allocation5 + $0x510] sm:$0xff]
    %v221 = vld [vmem:[#allocation5 + $0x518] sm:$0xff]
    %v222 = vld [vmem:[#allocation5 + $0x520] sm:$0xff]
    %v223 = vld [vmem:[#allocation5 + $0x528] sm:$0xff]
    %v224 = vld [vmem:[#allocation5 + $0x530] sm:$0xff]
    %v225 = vld [vmem:[#allocation5 + $0x538] sm:$0xff]
    %v226 = vld [vmem:[#allocation5 + $0x540] sm:$0xff]
    %v227 = vld [vmem:[#allocation5 + $0x548] sm:$0xff]
    %v228 = vld [vmem:[#allocation5 + $0x550] sm:$0xff]
    %v229 = vld [vmem:[#allocation5 + $0x558] sm:$0xff]
    %v230 = vld [vmem:[#allocation5 + $0x560] sm:$0xff]
    %v231 = vld [vmem:[#allocation5 + $0x568] sm:$0xff]
    %v232 = vld [vmem:[#allocation5 + $0x570] sm:$0xff]
    %v233 = vld [vmem:[#allocation5 + $0x578] sm:$0xff]
    %v234 = vld [vmem:[#allocation5 + $0x580] sm:$0xff]
    %v235 = vld [vmem:[#allocation5 + $0x588] sm:$0xff]
    %v236 = vld [vmem:[#allocation5 + $0x590] sm:$0xff]
    %v237 = vld [vmem:[#allocation5 + $0x598] sm:$0xff]
    %v238 = vld [vmem:[#allocation5 + $0x5a0] sm:$0xff]
    %v239 = vld [vmem:[#allocation5 + $0x5a8] sm:$0xff]
    %v240 = vld [vmem:[#allocation5 + $0x5b0] sm:$0xff]
    %v241 = vld [vmem:[#allocation5 + $0x5b8] sm:$0xff]
    %v242 = vld [vmem:[#allocation5 + $0x5c0] sm:$0xff]
    %v243 = vld [vmem:[#allocation5 + $0x5c8] sm:$0xff]
    %v244 = vld [vmem:[#allocation5 + $0x5d0] sm:$0xff]
    %v245 = vld [vmem:[#allocation5 + $0x5d8] sm:$0xff]
    %v246 = vld [vmem:[#allocation5 + $0x5e0] sm:$0xff]
    %v247 = vld [vmem:[#allocation5 + $0x5e8] sm:$0xff]
    %v248 = vld [vmem:[#allocation5 + $0x5f0] sm:$0xff]
    %v249 = vld [vmem:[#allocation5 + $0x5f8] sm:$0xff]
    %v250 = vld [vmem:[%s3] sm:$0xff]
    %v251 = vld [vmem:[%s3 + $0x8] sm:$0xff]
    %v252 = vld [vmem:[%s3 + $0x10] sm:$0xff]
    %v253 = vld [vmem:[%s3 + $0x18] sm:$0xff]
    %v254 = vcvt.s32.f32 %v250
    %v255 = vcvt.s32.f32 %v251
    %v256 = vcvt.s32.f32 %v252
    %v257 = vcvt.s32.f32 %v253
    %v258 = vld [vmem:[%s2] sm:$0xf]
    %v260 = vlaneseq
    %v261 = vshrl.u32 %v260, 7
    %v262 = vsub.s32 0, %v261
    %v263 = vrot.slane %v258, %v262
    %v264 = vlaneseq
    %v265 = vshrl.u32 %v264, 7
    %v266 = vsub.s32 1, %v265
    %v267 = vrot.slane %v258, %v266
    %v268 = vlaneseq
    %v269 = vshrl.u32 %v268, 7
    %v270 = vsub.s32 2, %v269
    %v271 = vrot.slane %v258, %v270
    %v272 = vlaneseq
    %v273 = vshrl.u32 %v272, 7
    %v274 = vsub.s32 3, %v273
    %v275 = vrot.slane %v258, %v274
    %v292 = vunpack.c.l.b16 %v46
    %v293 = vunpack.c.h.b16 %v46
    %v294 = vunpack.c.l.b16 %v47
    %v295 = vunpack.c.h.b16 %v47
    %v296 = vunpack.c.l.b16 %v48
    %v297 = vunpack.c.h.b16 %v48
    %v298 = vunpack.c.l.b16 %v49
    %v299 = vunpack.c.h.b16 %v49
    %v300 = vunpack.c.l.b16 %v50
    %v301 = vunpack.c.h.b16 %v50
    %v302 = vunpack.c.l.b16 %v51
    %v303 = vunpack.c.h.b16 %v51
    %v304 = vunpack.c.l.b16 %v52
    %v305 = vunpack.c.h.b16 %v52
    %v306 = vunpack.c.l.b16 %v53
    %v307 = vunpack.c.h.b16 %v53
    %v308 = vunpack.c.l.b16 %v54
    %v309 = vunpack.c.h.b16 %v54
    %v310 = vunpack.c.l.b16 %v55
    %v311 = vunpack.c.h.b16 %v55
    %v312 = vunpack.c.l.b16 %v56
    %v313 = vunpack.c.h.b16 %v56
    %v314 = vunpack.c.l.b16 %v57
    %v315 = vunpack.c.h.b16 %v57
    %v316 = vpack.c.b16 %v298, %v292
    %v317 = vpack.c.b16 %v299, %v293
    %v318 = vpack.c.b16 %v300, %v294
    %v319 = vpack.c.b16 %v301, %v295
    %v320 = vpack.c.b16 %v302, %v296
    %v321 = vpack.c.b16 %v303, %v297
    %v322 = vpack.c.b16 %v310, %v304
    %v323 = vpack.c.b16 %v311, %v305
    %v324 = vpack.c.b16 %v312, %v306
    %v325 = vpack.c.b16 %v313, %v307
    %v326 = vpack.c.b16 %v314, %v308
    %v327 = vpack.c.b16 %v315, %v309
    %v532 = vunpack.c.l.b16 %v58
    %v533 = vunpack.c.h.b16 %v58
    %v534 = vunpack.c.l.b16 %v59
    %v535 = vunpack.c.h.b16 %v59
    %v536 = vunpack.c.l.b16 %v60
    %v537 = vunpack.c.h.b16 %v60
    %v538 = vunpack.c.l.b16 %v61
    %v539 = vunpack.c.h.b16 %v61
    %v540 = vunpack.c.l.b16 %v62
    %v541 = vunpack.c.h.b16 %v62
    %v542 = vunpack.c.l.b16 %v63
    %v543 = vunpack.c.h.b16 %v63
    %v544 = vunpack.c.l.b16 %v64
    %v545 = vunpack.c.h.b16 %v64
    %v546 = vunpack.c.l.b16 %v65
    %v547 = vunpack.c.h.b16 %v65
    %v548 = vunpack.c.l.b16 %v66
    %v549 = vunpack.c.h.b16 %v66
    %v550 = vunpack.c.l.b16 %v67
    %v551 = vunpack.c.h.b16 %v67
    %v552 = vunpack.c.l.b16 %v68
    %v553 = vunpack.c.h.b16 %v68
    %v554 = vunpack.c.l.b16 %v69
    %v555 = vunpack.c.h.b16 %v69
    %v556 = vunpack.c.l.b16 %v70
    %v557 = vunpack.c.h.b16 %v70
    %v558 = vunpack.c.l.b16 %v71
    %v559 = vunpack.c.h.b16 %v71
    %v560 = vunpack.c.l.b16 %v72
    %v561 = vunpack.c.h.b16 %v72
    %v562 = vunpack.c.l.b16 %v73
    %v563 = vunpack.c.h.b16 %v73
    %v564 = vunpack.c.l.b16 %v74
    %v565 = vunpack.c.h.b16 %v74
    %v566 = vunpack.c.l.b16 %v75
    %v567 = vunpack.c.h.b16 %v75
    %v568 = vunpack.c.l.b16 %v76
    %v569 = vunpack.c.h.b16 %v76
    %v570 = vunpack.c.l.b16 %v77
    %v571 = vunpack.c.h.b16 %v77
    %v572 = vunpack.c.l.b16 %v78
    %v573 = vunpack.c.h.b16 %v78
    %v574 = vunpack.c.l.b16 %v79
    %v575 = vunpack.c.h.b16 %v79
    %v576 = vunpack.c.l.b16 %v80
    %v577 = vunpack.c.h.b16 %v80
    %v578 = vunpack.c.l.b16 %v81
    %v579 = vunpack.c.h.b16 %v81
    %v580 = vunpack.c.l.b16 %v82
    %v581 = vunpack.c.h.b16 %v82
    %v582 = vunpack.c.l.b16 %v83
    %v583 = vunpack.c.h.b16 %v83
    %v584 = vunpack.c.l.b16 %v84
    %v585 = vunpack.c.h.b16 %v84
    %v586 = vunpack.c.l.b16 %v85
    %v587 = vunpack.c.h.b16 %v85
    %v588 = vunpack.c.l.b16 %v86
    %v589 = vunpack.c.h.b16 %v86
    %v590 = vunpack.c.l.b16 %v87
    %v591 = vunpack.c.h.b16 %v87
    %v592 = vunpack.c.l.b16 %v88
    %v593 = vunpack.c.h.b16 %v88
    %v594 = vunpack.c.l.b16 %v89
    %v595 = vunpack.c.h.b16 %v89
    %v596 = vunpack.c.l.b16 %v90
    %v597 = vunpack.c.h.b16 %v90
    %v598 = vunpack.c.l.b16 %v91
    %v599 = vunpack.c.h.b16 %v91
    %v600 = vunpack.c.l.b16 %v92
    %v601 = vunpack.c.h.b16 %v92
    %v602 = vunpack.c.l.b16 %v93
    %v603 = vunpack.c.h.b16 %v93
    %v604 = vunpack.c.l.b16 %v94
    %v605 = vunpack.c.h.b16 %v94
    %v606 = vunpack.c.l.b16 %v95
    %v607 = vunpack.c.h.b16 %v95
    %v608 = vunpack.c.l.b16 %v96
    %v609 = vunpack.c.h.b16 %v96
    %v610 = vunpack.c.l.b16 %v97
    %v611 = vunpack.c.h.b16 %v97
    %v612 = vunpack.c.l.b16 %v98
    %v613 = vunpack.c.h.b16 %v98
    %v614 = vunpack.c.l.b16 %v99
    %v615 = vunpack.c.h.b16 %v99
    %v616 = vunpack.c.l.b16 %v100
    %v617 = vunpack.c.h.b16 %v100
    %v618 = vunpack.c.l.b16 %v101
    %v619 = vunpack.c.h.b16 %v101
    %v620 = vunpack.c.l.b16 %v102
    %v621 = vunpack.c.h.b16 %v102
    %v622 = vunpack.c.l.b16 %v103
    %v623 = vunpack.c.h.b16 %v103
    %v624 = vunpack.c.l.b16 %v104
    %v625 = vunpack.c.h.b16 %v104
    %v626 = vunpack.c.l.b16 %v105
    %v627 = vunpack.c.h.b16 %v105
    %v628 = vunpack.c.l.b16 %v106
    %v629 = vunpack.c.h.b16 %v106
    %v630 = vunpack.c.l.b16 %v107
    %v631 = vunpack.c.h.b16 %v107
    %v632 = vunpack.c.l.b16 %v108
    %v633 = vunpack.c.h.b16 %v108
    %v634 = vunpack.c.l.b16 %v109
    %v635 = vunpack.c.h.b16 %v109
    %v636 = vunpack.c.l.b16 %v110
    %v637 = vunpack.c.h.b16 %v110
    %v638 = vunpack.c.l.b16 %v111
    %v639 = vunpack.c.h.b16 %v111
    %v640 = vunpack.c.l.b16 %v112
    %v641 = vunpack.c.h.b16 %v112
    %v642 = vunpack.c.l.b16 %v113
    %v643 = vunpack.c.h.b16 %v113
    %v644 = vunpack.c.l.b16 %v114
    %v645 = vunpack.c.h.b16 %v114
    %v646 = vunpack.c.l.b16 %v115
    %v647 = vunpack.c.h.b16 %v115
    %v648 = vunpack.c.l.b16 %v116
    %v649 = vunpack.c.h.b16 %v116
    %v650 = vunpack.c.l.b16 %v117
    %v651 = vunpack.c.h.b16 %v117
    %v652 = vunpack.c.l.b16 %v118
    %v653 = vunpack.c.h.b16 %v118
    %v654 = vunpack.c.l.b16 %v119
    %v655 = vunpack.c.h.b16 %v119
    %v656 = vunpack.c.l.b16 %v120
    %v657 = vunpack.c.h.b16 %v120
    %v658 = vunpack.c.l.b16 %v121
    %v659 = vunpack.c.h.b16 %v121
    %v660 = vunpack.c.l.b16 %v122
    %v661 = vunpack.c.h.b16 %v122
    %v662 = vunpack.c.l.b16 %v123
    %v663 = vunpack.c.h.b16 %v123
    %v664 = vunpack.c.l.b16 %v124
    %v665 = vunpack.c.h.b16 %v124
    %v666 = vunpack.c.l.b16 %v125
    %v667 = vunpack.c.h.b16 %v125
    %v668 = vunpack.c.l.b16 %v126
    %v669 = vunpack.c.h.b16 %v126
    %v670 = vunpack.c.l.b16 %v127
    %v671 = vunpack.c.h.b16 %v127
    %v672 = vunpack.c.l.b16 %v128
    %v673 = vunpack.c.h.b16 %v128
    %v674 = vunpack.c.l.b16 %v129
    %v675 = vunpack.c.h.b16 %v129
    %v676 = vunpack.c.l.b16 %v130
    %v677 = vunpack.c.h.b16 %v130
    %v678 = vunpack.c.l.b16 %v131
    %v679 = vunpack.c.h.b16 %v131
    %v680 = vunpack.c.l.b16 %v132
    %v681 = vunpack.c.h.b16 %v132
    %v682 = vunpack.c.l.b16 %v133
    %v683 = vunpack.c.h.b16 %v133
    %v684 = vunpack.c.l.b16 %v134
    %v685 = vunpack.c.h.b16 %v134
    %v686 = vunpack.c.l.b16 %v135
    %v687 = vunpack.c.h.b16 %v135
    %v688 = vunpack.c.l.b16 %v136
    %v689 = vunpack.c.h.b16 %v136
    %v690 = vunpack.c.l.b16 %v137
    %v691 = vunpack.c.h.b16 %v137
    %v692 = vunpack.c.l.b16 %v138
    %v693 = vunpack.c.h.b16 %v138
    %v694 = vunpack.c.l.b16 %v139
    %v695 = vunpack.c.h.b16 %v139
    %v696 = vunpack.c.l.b16 %v140
    %v697 = vunpack.c.h.b16 %v140
    %v698 = vunpack.c.l.b16 %v141
    %v699 = vunpack.c.h.b16 %v141
    %v700 = vunpack.c.l.b16 %v142
    %v701 = vunpack.c.h.b16 %v142
    %v702 = vunpack.c.l.b16 %v143
    %v703 = vunpack.c.h.b16 %v143
    %v704 = vunpack.c.l.b16 %v144
    %v705 = vunpack.c.h.b16 %v144
    %v706 = vunpack.c.l.b16 %v145
    %v707 = vunpack.c.h.b16 %v145
    %v708 = vunpack.c.l.b16 %v146
    %v709 = vunpack.c.h.b16 %v146
    %v710 = vunpack.c.l.b16 %v147
    %v711 = vunpack.c.h.b16 %v147
    %v712 = vunpack.c.l.b16 %v148
    %v713 = vunpack.c.h.b16 %v148
    %v714 = vunpack.c.l.b16 %v149
    %v715 = vunpack.c.h.b16 %v149
    %v716 = vunpack.c.l.b16 %v150
    %v717 = vunpack.c.h.b16 %v150
    %v718 = vunpack.c.l.b16 %v151
    %v719 = vunpack.c.h.b16 %v151
    %v720 = vunpack.c.l.b16 %v152
    %v721 = vunpack.c.h.b16 %v152
    %v722 = vunpack.c.l.b16 %v153
    %v723 = vunpack.c.h.b16 %v153
    %v724 = vunpack.c.l.b16 %v154
    %v725 = vunpack.c.h.b16 %v154
    %v726 = vunpack.c.l.b16 %v155
    %v727 = vunpack.c.h.b16 %v155
    %v728 = vunpack.c.l.b16 %v156
    %v729 = vunpack.c.h.b16 %v156
    %v730 = vunpack.c.l.b16 %v157
    %v731 = vunpack.c.h.b16 %v157
    %v732 = vunpack.c.l.b16 %v158
    %v733 = vunpack.c.h.b16 %v158
    %v734 = vunpack.c.l.b16 %v159
    %v735 = vunpack.c.h.b16 %v159
    %v736 = vunpack.c.l.b16 %v160
    %v737 = vunpack.c.h.b16 %v160
    %v738 = vunpack.c.l.b16 %v161
    %v739 = vunpack.c.h.b16 %v161
    %v740 = vunpack.c.l.b16 %v162
    %v741 = vunpack.c.h.b16 %v162
    %v742 = vunpack.c.l.b16 %v163
    %v743 = vunpack.c.h.b16 %v163
    %v744 = vunpack.c.l.b16 %v164
    %v745 = vunpack.c.h.b16 %v164
    %v746 = vunpack.c.l.b16 %v165
    %v747 = vunpack.c.h.b16 %v165
    %v748 = vunpack.c.l.b16 %v166
    %v749 = vunpack.c.h.b16 %v166
    %v750 = vunpack.c.l.b16 %v167
    %v751 = vunpack.c.h.b16 %v167
    %v752 = vunpack.c.l.b16 %v168
    %v753 = vunpack.c.h.b16 %v168
    %v754 = vunpack.c.l.b16 %v169
    %v755 = vunpack.c.h.b16 %v169
    %v756 = vunpack.c.l.b16 %v170
    %v757 = vunpack.c.h.b16 %v170
    %v758 = vunpack.c.l.b16 %v171
    %v759 = vunpack.c.h.b16 %v171
    %v760 = vunpack.c.l.b16 %v172
    %v761 = vunpack.c.h.b16 %v172
    %v762 = vunpack.c.l.b16 %v173
    %v763 = vunpack.c.h.b16 %v173
    %v764 = vunpack.c.l.b16 %v174
    %v765 = vunpack.c.h.b16 %v174
    %v766 = vunpack.c.l.b16 %v175
    %v767 = vunpack.c.h.b16 %v175
    %v768 = vunpack.c.l.b16 %v176
    %v769 = vunpack.c.h.b16 %v176
    %v770 = vunpack.c.l.b16 %v177
    %v771 = vunpack.c.h.b16 %v177
    %v772 = vunpack.c.l.b16 %v178
    %v773 = vunpack.c.h.b16 %v178
    %v774 = vunpack.c.l.b16 %v179
    %v775 = vunpack.c.h.b16 %v179
    %v776 = vunpack.c.l.b16 %v180
    %v777 = vunpack.c.h.b16 %v180
    %v778 = vunpack.c.l.b16 %v181
    %v779 = vunpack.c.h.b16 %v181
    %v780 = vunpack.c.l.b16 %v182
    %v781 = vunpack.c.h.b16 %v182
    %v782 = vunpack.c.l.b16 %v183
    %v783 = vunpack.c.h.b16 %v183
    %v784 = vunpack.c.l.b16 %v184
    %v785 = vunpack.c.h.b16 %v184
    %v786 = vunpack.c.l.b16 %v185
    %v787 = vunpack.c.h.b16 %v185
    %v788 = vunpack.c.l.b16 %v186
    %v789 = vunpack.c.h.b16 %v186
    %v790 = vunpack.c.l.b16 %v187
    %v791 = vunpack.c.h.b16 %v187
    %v792 = vunpack.c.l.b16 %v188
    %v793 = vunpack.c.h.b16 %v188
    %v794 = vunpack.c.l.b16 %v189
    %v795 = vunpack.c.h.b16 %v189
    %v796 = vunpack.c.l.b16 %v190
    %v797 = vunpack.c.h.b16 %v190
    %v798 = vunpack.c.l.b16 %v191
    %v799 = vunpack.c.h.b16 %v191
    %v800 = vunpack.c.l.b16 %v192
    %v801 = vunpack.c.h.b16 %v192
    %v802 = vunpack.c.l.b16 %v193
    %v803 = vunpack.c.h.b16 %v193
    %v804 = vunpack.c.l.b16 %v194
    %v805 = vunpack.c.h.b16 %v194
    %v806 = vunpack.c.l.b16 %v195
    %v807 = vunpack.c.h.b16 %v195
    %v808 = vunpack.c.l.b16 %v196
    %v809 = vunpack.c.h.b16 %v196
    %v810 = vunpack.c.l.b16 %v197
    %v811 = vunpack.c.h.b16 %v197
    %v812 = vunpack.c.l.b16 %v198
    %v813 = vunpack.c.h.b16 %v198
    %v814 = vunpack.c.l.b16 %v199
    %v815 = vunpack.c.h.b16 %v199
    %v816 = vunpack.c.l.b16 %v200
    %v817 = vunpack.c.h.b16 %v200
    %v818 = vunpack.c.l.b16 %v201
    %v819 = vunpack.c.h.b16 %v201
    %v820 = vunpack.c.l.b16 %v202
    %v821 = vunpack.c.h.b16 %v202
    %v822 = vunpack.c.l.b16 %v203
    %v823 = vunpack.c.h.b16 %v203
    %v824 = vunpack.c.l.b16 %v204
    %v825 = vunpack.c.h.b16 %v204
    %v826 = vunpack.c.l.b16 %v205
    %v827 = vunpack.c.h.b16 %v205
    %v828 = vunpack.c.l.b16 %v206
    %v829 = vunpack.c.h.b16 %v206
    %v830 = vunpack.c.l.b16 %v207
    %v831 = vunpack.c.h.b16 %v207
    %v832 = vunpack.c.l.b16 %v208
    %v833 = vunpack.c.h.b16 %v208
    %v834 = vunpack.c.l.b16 %v209
    %v835 = vunpack.c.h.b16 %v209
    %v836 = vunpack.c.l.b16 %v210
    %v837 = vunpack.c.h.b16 %v210
    %v838 = vunpack.c.l.b16 %v211
    %v839 = vunpack.c.h.b16 %v211
    %v840 = vunpack.c.l.b16 %v212
    %v841 = vunpack.c.h.b16 %v212
    %v842 = vunpack.c.l.b16 %v213
    %v843 = vunpack.c.h.b16 %v213
    %v844 = vunpack.c.l.b16 %v214
    %v845 = vunpack.c.h.b16 %v214
    %v846 = vunpack.c.l.b16 %v215
    %v847 = vunpack.c.h.b16 %v215
    %v848 = vunpack.c.l.b16 %v216
    %v849 = vunpack.c.h.b16 %v216
    %v850 = vunpack.c.l.b16 %v217
    %v851 = vunpack.c.h.b16 %v217
    %v852 = vunpack.c.l.b16 %v218
    %v853 = vunpack.c.h.b16 %v218
    %v854 = vunpack.c.l.b16 %v219
    %v855 = vunpack.c.h.b16 %v219
    %v856 = vunpack.c.l.b16 %v220
    %v857 = vunpack.c.h.b16 %v220
    %v858 = vunpack.c.l.b16 %v221
    %v859 = vunpack.c.h.b16 %v221
    %v860 = vunpack.c.l.b16 %v222
    %v861 = vunpack.c.h.b16 %v222
    %v862 = vunpack.c.l.b16 %v223
    %v863 = vunpack.c.h.b16 %v223
    %v864 = vunpack.c.l.b16 %v224
    %v865 = vunpack.c.h.b16 %v224
    %v866 = vunpack.c.l.b16 %v225
    %v867 = vunpack.c.h.b16 %v225
    %v868 = vunpack.c.l.b16 %v226
    %v869 = vunpack.c.h.b16 %v226
    %v870 = vunpack.c.l.b16 %v227
    %v871 = vunpack.c.h.b16 %v227
    %v872 = vunpack.c.l.b16 %v228
    %v873 = vunpack.c.h.b16 %v228
    %v874 = vunpack.c.l.b16 %v229
    %v875 = vunpack.c.h.b16 %v229
    %v876 = vunpack.c.l.b16 %v230
    %v877 = vunpack.c.h.b16 %v230
    %v878 = vunpack.c.l.b16 %v231
    %v879 = vunpack.c.h.b16 %v231
    %v880 = vunpack.c.l.b16 %v232
    %v881 = vunpack.c.h.b16 %v232
    %v882 = vunpack.c.l.b16 %v233
    %v883 = vunpack.c.h.b16 %v233
    %v884 = vunpack.c.l.b16 %v234
    %v885 = vunpack.c.h.b16 %v234
    %v886 = vunpack.c.l.b16 %v235
    %v887 = vunpack.c.h.b16 %v235
    %v888 = vunpack.c.l.b16 %v236
    %v889 = vunpack.c.h.b16 %v236
    %v890 = vunpack.c.l.b16 %v237
    %v891 = vunpack.c.h.b16 %v237
    %v892 = vunpack.c.l.b16 %v238
    %v893 = vunpack.c.h.b16 %v238
    %v894 = vunpack.c.l.b16 %v239
    %v895 = vunpack.c.h.b16 %v239
    %v896 = vunpack.c.l.b16 %v240
    %v897 = vunpack.c.h.b16 %v240
    %v898 = vunpack.c.l.b16 %v241
    %v899 = vunpack.c.h.b16 %v241
    %v900 = vunpack.c.l.b16 %v242
    %v901 = vunpack.c.h.b16 %v242
    %v902 = vunpack.c.l.b16 %v243
    %v903 = vunpack.c.h.b16 %v243
    %v904 = vunpack.c.l.b16 %v244
    %v905 = vunpack.c.h.b16 %v244
    %v906 = vunpack.c.l.b16 %v245
    %v907 = vunpack.c.h.b16 %v245
    %v908 = vunpack.c.l.b16 %v246
    %v909 = vunpack.c.h.b16 %v246
    %v910 = vunpack.c.l.b16 %v247
    %v911 = vunpack.c.h.b16 %v247
    %v912 = vunpack.c.l.b16 %v248
    %v913 = vunpack.c.h.b16 %v248
    %v914 = vunpack.c.l.b16 %v249
    %v915 = vunpack.c.h.b16 %v249
    %v916 = vpack.c.b16 %v536, %v532
    %v917 = vpack.c.b16 %v537, %v533
    %v918 = vpack.c.b16 %v538, %v534
    %v919 = vpack.c.b16 %v539, %v535
    %v920 = vpack.c.b16 %v544, %v540
    %v921 = vpack.c.b16 %v545, %v541
    %v922 = vpack.c.b16 %v546, %v542
    %v923 = vpack.c.b16 %v547, %v543
    %v924 = vpack.c.b16 %v552, %v548
    %v925 = vpack.c.b16 %v553, %v549
    %v926 = vpack.c.b16 %v554, %v550
    %v927 = vpack.c.b16 %v555, %v551
    %v928 = vpack.c.b16 %v560, %v556
    %v929 = vpack.c.b16 %v561, %v557
    %v930 = vpack.c.b16 %v562, %v558
    %v931 = vpack.c.b16 %v563, %v559
    %v932 = vpack.c.b16 %v568, %v564
    %v933 = vpack.c.b16 %v569, %v565
    %v934 = vpack.c.b16 %v570, %v566
    %v935 = vpack.c.b16 %v571, %v567
    %v936 = vpack.c.b16 %v576, %v572
    %v937 = vpack.c.b16 %v577, %v573
    %v938 = vpack.c.b16 %v578, %v574
    %v939 = vpack.c.b16 %v579, %v575
    %v940 = vpack.c.b16 %v584, %v580
    %v941 = vpack.c.b16 %v585, %v581
    %v942 = vpack.c.b16 %v586, %v582
    %v943 = vpack.c.b16 %v587, %v583
    %v944 = vpack.c.b16 %v592, %v588
    %v945 = vpack.c.b16 %v593, %v589
    %v946 = vpack.c.b16 %v594, %v590
    %v947 = vpack.c.b16 %v595, %v591
    %v948 = vpack.c.b16 %v600, %v596
    %v949 = vpack.c.b16 %v601, %v597
    %v950 = vpack.c.b16 %v602, %v598
    %v951 = vpack.c.b16 %v603, %v599
    %v952 = vpack.c.b16 %v608, %v604
    %v953 = vpack.c.b16 %v609, %v605
    %v954 = vpack.c.b16 %v610, %v606
    %v955 = vpack.c.b16 %v611, %v607
    %v956 = vpack.c.b16 %v616, %v612
    %v957 = vpack.c.b16 %v617, %v613
    %v958 = vpack.c.b16 %v618, %v614
    %v959 = vpack.c.b16 %v619, %v615
    %v960 = vpack.c.b16 %v624, %v620
    %v961 = vpack.c.b16 %v625, %v621
    %v962 = vpack.c.b16 %v626, %v622
    %v963 = vpack.c.b16 %v627, %v623
    %v964 = vpack.c.b16 %v632, %v628
    %v965 = vpack.c.b16 %v633, %v629
    %v966 = vpack.c.b16 %v634, %v630
    %v967 = vpack.c.b16 %v635, %v631
    %v968 = vpack.c.b16 %v640, %v636
    %v969 = vpack.c.b16 %v641, %v637
    %v970 = vpack.c.b16 %v642, %v638
    %v971 = vpack.c.b16 %v643, %v639
    %v972 = vpack.c.b16 %v648, %v644
    %v973 = vpack.c.b16 %v649, %v645
    %v974 = vpack.c.b16 %v650, %v646
    %v975 = vpack.c.b16 %v651, %v647
    %v976 = vpack.c.b16 %v656, %v652
    %v977 = vpack.c.b16 %v657, %v653
    %v978 = vpack.c.b16 %v658, %v654
    %v979 = vpack.c.b16 %v659, %v655
    %v980 = vpack.c.b16 %v664, %v660
    %v981 = vpack.c.b16 %v665, %v661
    %v982 = vpack.c.b16 %v666, %v662
    %v983 = vpack.c.b16 %v667, %v663
    %v984 = vpack.c.b16 %v672, %v668
    %v985 = vpack.c.b16 %v673, %v669
    %v986 = vpack.c.b16 %v674, %v670
    %v987 = vpack.c.b16 %v675, %v671
    %v988 = vpack.c.b16 %v680, %v676
    %v989 = vpack.c.b16 %v681, %v677
    %v990 = vpack.c.b16 %v682, %v678
    %v991 = vpack.c.b16 %v683, %v679
    %v992 = vpack.c.b16 %v688, %v684
    %v993 = vpack.c.b16 %v689, %v685
    %v994 = vpack.c.b16 %v690, %v686
    %v995 = vpack.c.b16 %v691, %v687
    %v996 = vpack.c.b16 %v696, %v692
    %v997 = vpack.c.b16 %v697, %v693
    %v998 = vpack.c.b16 %v698, %v694
    %v999 = vpack.c.b16 %v699, %v695
    %v1000 = vpack.c.b16 %v704, %v700
    %v1001 = vpack.c.b16 %v705, %v701
    %v1002 = vpack.c.b16 %v706, %v702
    %v1003 = vpack.c.b16 %v707, %v703
    %v1004 = vpack.c.b16 %v712, %v708
    %v1005 = vpack.c.b16 %v713, %v709
    %v1006 = vpack.c.b16 %v714, %v710
    %v1007 = vpack.c.b16 %v715, %v711
    %v1008 = vpack.c.b16 %v720, %v716
    %v1009 = vpack.c.b16 %v721, %v717
    %v1010 = vpack.c.b16 %v722, %v718
    %v1011 = vpack.c.b16 %v723, %v719
    %v1012 = vpack.c.b16 %v728, %v724
    %v1013 = vpack.c.b16 %v729, %v725
    %v1014 = vpack.c.b16 %v730, %v726
    %v1015 = vpack.c.b16 %v731, %v727
    %v1016 = vpack.c.b16 %v736, %v732
    %v1017 = vpack.c.b16 %v737, %v733
    %v1018 = vpack.c.b16 %v738, %v734
    %v1019 = vpack.c.b16 %v739, %v735
    %v1020 = vpack.c.b16 %v744, %v740
    %v1021 = vpack.c.b16 %v745, %v741
    %v1022 = vpack.c.b16 %v746, %v742
    %v1023 = vpack.c.b16 %v747, %v743
    %v1024 = vpack.c.b16 %v752, %v748
    %v1025 = vpack.c.b16 %v753, %v749
    %v1026 = vpack.c.b16 %v754, %v750
    %v1027 = vpack.c.b16 %v755, %v751
    %v1028 = vpack.c.b16 %v760, %v756
    %v1029 = vpack.c.b16 %v761, %v757
    %v1030 = vpack.c.b16 %v762, %v758
    %v1031 = vpack.c.b16 %v763, %v759
    %v1032 = vpack.c.b16 %v768, %v764
    %v1033 = vpack.c.b16 %v769, %v765
    %v1034 = vpack.c.b16 %v770, %v766
    %v1035 = vpack.c.b16 %v771, %v767
    %v1036 = vpack.c.b16 %v776, %v772
    %v1037 = vpack.c.b16 %v777, %v773
    %v1038 = vpack.c.b16 %v778, %v774
    %v1039 = vpack.c.b16 %v779, %v775
    %v1040 = vpack.c.b16 %v784, %v780
    %v1041 = vpack.c.b16 %v785, %v781
    %v1042 = vpack.c.b16 %v786, %v782
    %v1043 = vpack.c.b16 %v787, %v783
    %v1044 = vpack.c.b16 %v792, %v788
    %v1045 = vpack.c.b16 %v793, %v789
    %v1046 = vpack.c.b16 %v794, %v790
    %v1047 = vpack.c.b16 %v795, %v791
    %v1048 = vpack.c.b16 %v800, %v796
    %v1049 = vpack.c.b16 %v801, %v797
    %v1050 = vpack.c.b16 %v802, %v798
    %v1051 = vpack.c.b16 %v803, %v799
    %v1052 = vpack.c.b16 %v808, %v804
    %v1053 = vpack.c.b16 %v809, %v805
    %v1054 = vpack.c.b16 %v810, %v806
    %v1055 = vpack.c.b16 %v811, %v807
    %v1056 = vpack.c.b16 %v816, %v812
    %v1057 = vpack.c.b16 %v817, %v813
    %v1058 = vpack.c.b16 %v818, %v814
    %v1059 = vpack.c.b16 %v819, %v815
    %v1060 = vpack.c.b16 %v824, %v820
    %v1061 = vpack.c.b16 %v825, %v821
    %v1062 = vpack.c.b16 %v826, %v822
    %v1063 = vpack.c.b16 %v827, %v823
    %v1064 = vpack.c.b16 %v832, %v828
    %v1065 = vpack.c.b16 %v833, %v829
    %v1066 = vpack.c.b16 %v834, %v830
    %v1067 = vpack.c.b16 %v835, %v831
    %v1068 = vpack.c.b16 %v840, %v836
    %v1069 = vpack.c.b16 %v841, %v837
    %v1070 = vpack.c.b16 %v842, %v838
    %v1071 = vpack.c.b16 %v843, %v839
    %v1072 = vpack.c.b16 %v848, %v844
    %v1073 = vpack.c.b16 %v849, %v845
    %v1074 = vpack.c.b16 %v850, %v846
    %v1075 = vpack.c.b16 %v851, %v847
    %v1076 = vpack.c.b16 %v856, %v852
    %v1077 = vpack.c.b16 %v857, %v853
    %v1078 = vpack.c.b16 %v858, %v854
    %v1079 = vpack.c.b16 %v859, %v855
    %v1080 = vpack.c.b16 %v864, %v860
    %v1081 = vpack.c.b16 %v865, %v861
    %v1082 = vpack.c.b16 %v866, %v862
    %v1083 = vpack.c.b16 %v867, %v863
    %v1084 = vpack.c.b16 %v872, %v868
    %v1085 = vpack.c.b16 %v873, %v869
    %v1086 = vpack.c.b16 %v874, %v870
    %v1087 = vpack.c.b16 %v875, %v871
    %v1088 = vpack.c.b16 %v880, %v876
    %v1089 = vpack.c.b16 %v881, %v877
    %v1090 = vpack.c.b16 %v882, %v878
    %v1091 = vpack.c.b16 %v883, %v879
    %v1092 = vpack.c.b16 %v888, %v884
    %v1093 = vpack.c.b16 %v889, %v885
    %v1094 = vpack.c.b16 %v890, %v886
    %v1095 = vpack.c.b16 %v891, %v887
    %v1096 = vpack.c.b16 %v896, %v892
    %v1097 = vpack.c.b16 %v897, %v893
    %v1098 = vpack.c.b16 %v898, %v894
    %v1099 = vpack.c.b16 %v899, %v895
    %v1100 = vpack.c.b16 %v904, %v900
    %v1101 = vpack.c.b16 %v905, %v901
    %v1102 = vpack.c.b16 %v906, %v902
    %v1103 = vpack.c.b16 %v907, %v903
    %v1104 = vpack.c.b16 %v912, %v908
    %v1105 = vpack.c.b16 %v913, %v909
    %v1106 = vpack.c.b16 %v914, %v910
    %v1107 = vpack.c.b16 %v915, %v911
    %1300 = vmatprep.subr.bf16.mxu0 %v917
    %1301 = vmatpush1.bf16.msra.mxu0 %v916
    %1302 = vmatprep.subr.bf16.mxu0 %v921
    %1303 = vmatpush1.bf16.msra.mxu0 %v920
    %1304 = vmatprep.subr.bf16.mxu0 %v925
    %1305 = vmatpush1.bf16.msra.mxu0 %v924
    %1306 = vmatprep.subr.bf16.mxu0 %v929
    %1307 = vmatpush1.bf16.msra.mxu0 %v928
    %1308 = vmatprep.subr.bf16.mxu0 %v933
    %1309 = vmatpush1.bf16.msra.mxu0 %v932
    %1310 = vmatprep.subr.bf16.mxu0 %v937
    %1311 = vmatpush1.bf16.msra.mxu0 %v936
    %1312 = vmatprep.subr.bf16.mxu0 %v941
    %1313 = vmatpush1.bf16.msra.mxu0 %v940
    %1314 = vmatprep.subr.bf16.mxu0 %v945
    %1315 = vmatpush1.bf16.msra.mxu0 %v944
    %1316 = vmatprep.subr.bf16.mxu0 %v949
    %1317 = vmatpush1.bf16.msra.mxu0 %v948
    %1318 = vmatprep.subr.bf16.mxu0 %v953
    %1319 = vmatpush1.bf16.msra.mxu0 %v952
    %1320 = vmatprep.subr.bf16.mxu0 %v957
    %1321 = vmatpush1.bf16.msra.mxu0 %v956
    %1322 = vmatprep.subr.bf16.mxu0 %v961
    %1323 = vmatpush1.bf16.msra.mxu0 %v960
    %1324 = vmatprep.subr.bf16.mxu0 %v965
    %1325 = vmatpush1.bf16.msra.mxu0 %v964
    %1326 = vmatprep.subr.bf16.mxu0 %v969
    %1327 = vmatpush1.bf16.msra.mxu0 %v968
    %1328 = vmatprep.subr.bf16.mxu0 %v973
    %1329 = vmatpush1.bf16.msra.mxu0 %v972
    %1330 = vmatprep.subr.bf16.mxu0 %v977
    %1331 = vmatpush1.bf16.msra.mxu0 %v976
    %1332 = vmatprep.mubr.bf16.mxu0 %v317
    %1333 = vmatmul.mubr.bf16.gmra.mrb[0].mxu0 %v316
    %v1334 = vpop.f32.mrb[0].mxu0
    %v1335 = vadd.f32 %v263, %v1334
    %v1336 = vpop.f32.mrb[0].mxu0
    %v1337 = vadd.f32 %v267, %v1336
    %v1338 = vpop.f32.mrb[0].mxu0
    %v1339 = vadd.f32 %v263, %v1338
    %v1340 = vpop.f32.mrb[0].mxu0
    %v1341 = vadd.f32 %v267, %v1340
    %1342 = vmatprep.mubr.bf16.mxu0 %v323
    %1343 = vmatmul.mubr.bf16.gmra.mrb[0].mxu0 %v322
    %v1344 = vpop.f32.mrb[0].mxu0
    %v1345 = vadd.f32 %v263, %v1344
    %v1346 = vpop.f32.mrb[0].mxu0
    %v1347 = vadd.f32 %v267, %v1346
    %v1348 = vpop.f32.mrb[0].mxu0
    %v1349 = vadd.f32 %v263, %v1348
    %v1350 = vpop.f32.mrb[0].mxu0
    %v1351 = vadd.f32 %v267, %v1350
    %1352 = vdwg.mxu0
    %1353 = vmatprep.subr.bf16.mxu0 %v981
    %1354 = vmatpush1.bf16.msra.mxu0 %v980
    %1355 = vmatprep.subr.bf16.mxu0 %v985
    %1356 = vmatpush1.bf16.msra.mxu0 %v984
    %1357 = vmatprep.subr.bf16.mxu0 %v989
    %1358 = vmatpush1.bf16.msra.mxu0 %v988
    %1359 = vmatprep.subr.bf16.mxu0 %v993
    %1360 = vmatpush1.bf16.msra.mxu0 %v992
    %1361 = vmatprep.subr.bf16.mxu0 %v997
    %1362 = vmatpush1.bf16.msra.mxu0 %v996
    %1363 = vmatprep.subr.bf16.mxu0 %v1001
    %1364 = vmatpush1.bf16.msra.mxu0 %v1000
    %1365 = vmatprep.subr.bf16.mxu0 %v1005
    %1366 = vmatpush1.bf16.msra.mxu0 %v1004
    %1367 = vmatprep.subr.bf16.mxu0 %v1009
    %1368 = vmatpush1.bf16.msra.mxu0 %v1008
    %1369 = vmatprep.subr.bf16.mxu0 %v1013
    %1370 = vmatpush1.bf16.msra.mxu0 %v1012
    %1371 = vmatprep.subr.bf16.mxu0 %v1017
    %1372 = vmatpush1.bf16.msra.mxu0 %v1016
    %1373 = vmatprep.subr.bf16.mxu0 %v1021
    %1374 = vmatpush1.bf16.msra.mxu0 %v1020
    %1375 = vmatprep.subr.bf16.mxu0 %v1025
    %1376 = vmatpush1.bf16.msra.mxu0 %v1024
    %1377 = vmatprep.subr.bf16.mxu0 %v1029
    %1378 = vmatpush1.bf16.msra.mxu0 %v1028
    %1379 = vmatprep.subr.bf16.mxu0 %v1033
    %1380 = vmatpush1.bf16.msra.mxu0 %v1032
    %1381 = vmatprep.subr.bf16.mxu0 %v1037
    %1382 = vmatpush1.bf16.msra.mxu0 %v1036
    %1383 = vmatprep.subr.bf16.mxu0 %v1041
    %1384 = vmatpush1.bf16.msra.mxu0 %v1040
    %1385 = vmatprep.mubr.bf16.mxu0 %v319
    %1386 = vmatmul.mubr.bf16.gmra.mrb[0].mxu0 %v318
    %v1387 = vpop.f32.mrb[0].mxu0
    %v1388 = vadd.f32 %v1335, %v1387
    %v1389 = vpop.f32.mrb[0].mxu0
    %v1390 = vadd.f32 %v1337, %v1389
    %v1391 = vpop.f32.mrb[0].mxu0
    %v1392 = vadd.f32 %v1339, %v1391
    %v1393 = vpop.f32.mrb[0].mxu0
    %v1394 = vadd.f32 %v1341, %v1393
    %1395 = vmatprep.mubr.bf16.mxu0 %v325
    %1396 = vmatmul.mubr.bf16.gmra.mrb[0].mxu0 %v324
    %v1397 = vpop.f32.mrb[0].mxu0
    %v1398 = vadd.f32 %v1345, %v1397
    %v1399 = vpop.f32.mrb[0].mxu0
    %v1400 = vadd.f32 %v1347, %v1399
    %v1401 = vpop.f32.mrb[0].mxu0
    %v1402 = vadd.f32 %v1349, %v1401
    %v1403 = vpop.f32.mrb[0].mxu0
    %v1404 = vadd.f32 %v1351, %v1403
    %1405 = vdwg.mxu0
    %1406 = vmatprep.subr.bf16.mxu0 %v1045
    %1407 = vmatpush1.bf16.msra.mxu0 %v1044
    %1408 = vmatprep.subr.bf16.mxu0 %v1049
    %1409 = vmatpush1.bf16.msra.mxu0 %v1048
    %1410 = vmatprep.subr.bf16.mxu0 %v1053
    %1411 = vmatpush1.bf16.msra.mxu0 %v1052
    %1412 = vmatprep.subr.bf16.mxu0 %v1057
    %1413 = vmatpush1.bf16.msra.mxu0 %v1056
    %1414 = vmatprep.subr.bf16.mxu0 %v1061
    %1415 = vmatpush1.bf16.msra.mxu0 %v1060
    %1416 = vmatprep.subr.bf16.mxu0 %v1065
    %1417 = vmatpush1.bf16.msra.mxu0 %v1064
    %1418 = vmatprep.subr.bf16.mxu0 %v1069
    %1419 = vmatpush1.bf16.msra.mxu0 %v1068
    %1420 = vmatprep.subr.bf16.mxu0 %v1073
    %1421 = vmatpush1.bf16.msra.mxu0 %v1072
    %1422 = vmatprep.subr.bf16.mxu0 %v1077
    %1423 = vmatpush1.bf16.msra.mxu0 %v1076
    %1424 = vmatprep.subr.bf16.mxu0 %v1081
    %1425 = vmatpush1.bf16.msra.mxu0 %v1080
    %1426 = vmatprep.subr.bf16.mxu0 %v1085
    %1427 = vmatpush1.bf16.msra.mxu0 %v1084
    %1428 = vmatprep.subr.bf16.mxu0 %v1089
    %1429 = vmatpush1.bf16.msra.mxu0 %v1088
    %1430 = vmatprep.subr.bf16.mxu0 %v1093
    %1431 = vmatpush1.bf16.msra.mxu0 %v1092
    %1432 = vmatprep.subr.bf16.mxu0 %v1097
    %1433 = vmatpush1.bf16.msra.mxu0 %v1096
    %1434 = vmatprep.subr.bf16.mxu0 %v1101
    %1435 = vmatpush1.bf16.msra.mxu0 %v1100
    %1436 = vmatprep.subr.bf16.mxu0 %v1105
    %1437 = vmatpush1.bf16.msra.mxu0 %v1104
    %1438 = vmatprep.mubr.bf16.mxu0 %v321
    %1439 = vmatmul.mubr.bf16.gmra.mrb[0].mxu0 %v320
    %v1440 = vpop.f32.mrb[0].mxu0
    %v1441 = vadd.f32 %v1388, %v1440
    %v1442 = vpop.f32.mrb[0].mxu0
    %v1443 = vadd.f32 %v1390, %v1442
    %v1444 = vpop.f32.mrb[0].mxu0
    %v1445 = vadd.f32 %v1392, %v1444
    %v1446 = vpop.f32.mrb[0].mxu0
    %v1447 = vadd.f32 %v1394, %v1446
    %1448 = vmatprep.mubr.bf16.mxu0 %v327
    %1449 = vmatmul.mubr.bf16.gmra.mrb[0].mxu0 %v326
    %v1450 = vpop.f32.mrb[0].mxu0
    %v1451 = vadd.f32 %v1398, %v1450
    %v1452 = vpop.f32.mrb[0].mxu0
    %v1453 = vadd.f32 %v1400, %v1452
    %v1454 = vpop.f32.mrb[0].mxu0
    %v1455 = vadd.f32 %v1402, %v1454
    %v1456 = vpop.f32.mrb[0].mxu0
    %v1457 = vadd.f32 %v1404, %v1456
    %1458 = vdwg.mxu0
    %1459 = vmatprep.subr.bf16.mxu0 %v919
    %1460 = vmatpush1.bf16.msra.mxu0 %v918
    %1461 = vmatprep.subr.bf16.mxu0 %v923
    %1462 = vmatpush1.bf16.msra.mxu0 %v922
    %1463 = vmatprep.subr.bf16.mxu0 %v927
    %1464 = vmatpush1.bf16.msra.mxu0 %v926
    %1465 = vmatprep.subr.bf16.mxu0 %v931
    %1466 = vmatpush1.bf16.msra.mxu0 %v930
    %1467 = vmatprep.subr.bf16.mxu0 %v935
    %1468 = vmatpush1.bf16.msra.mxu0 %v934
    %1469 = vmatprep.subr.bf16.mxu0 %v939
    %1470 = vmatpush1.bf16.msra.mxu0 %v938
    %1471 = vmatprep.subr.bf16.mxu0 %v943
    %1472 = vmatpush1.bf16.msra.mxu0 %v942
    %1473 = vmatprep.subr.bf16.mxu0 %v947
    %1474 = vmatpush1.bf16.msra.mxu0 %v946
    %1475 = vmatprep.subr.bf16.mxu0 %v951
    %1476 = vmatpush1.bf16.msra.mxu0 %v950
    %1477 = vmatprep.subr.bf16.mxu0 %v955
    %1478 = vmatpush1.bf16.msra.mxu0 %v954
    %1479 = vmatprep.subr.bf16.mxu0 %v959
    %1480 = vmatpush1.bf16.msra.mxu0 %v958
    %1481 = vmatprep.subr.bf16.mxu0 %v963
    %1482 = vmatpush1.bf16.msra.mxu0 %v962
    %1483 = vmatprep.subr.bf16.mxu0 %v967
    %1484 = vmatpush1.bf16.msra.mxu0 %v966
    %1485 = vmatprep.subr.bf16.mxu0 %v971
    %1486 = vmatpush1.bf16.msra.mxu0 %v970
    %1487 = vmatprep.subr.bf16.mxu0 %v975
    %1488 = vmatpush1.bf16.msra.mxu0 %v974
    %1489 = vmatprep.subr.bf16.mxu0 %v979
    %1490 = vmatpush1.bf16.msra.mxu0 %v978
    %1491 = vmatprep.mubr.bf16.mxu0 %v317
    %1492 = vmatmul.mubr.bf16.gmra.mrb[0].mxu0 %v316
    %v1493 = vpop.f32.mrb[0].mxu0
    %v1494 = vadd.f32 %v271, %v1493
    %v1495 = vpop.f32.mrb[0].mxu0
    %v1496 = vadd.f32 %v275, %v1495
    %v1497 = vpop.f32.mrb[0].mxu0
    %v1498 = vadd.f32 %v271, %v1497
    %v1499 = vpop.f32.mrb[0].mxu0
    %v1500 = vadd.f32 %v275, %v1499
    %1501 = vmatprep.mubr.bf16.mxu0 %v323
    %1502 = vmatmul.mubr.bf16.gmra.mrb[0].mxu0 %v322
    %v1503 = vpop.f32.mrb[0].mxu0
    %v1504 = vadd.f32 %v271, %v1503
    %v1505 = vpop.f32.mrb[0].mxu0
    %v1506 = vadd.f32 %v275, %v1505
    %v1507 = vpop.f32.mrb[0].mxu0
    %v1508 = vadd.f32 %v271, %v1507
    %v1509 = vpop.f32.mrb[0].mxu0
    %v1510 = vadd.f32 %v275, %v1509
    %1511 = vdwg.mxu0
    %1512 = vmatprep.subr.bf16.mxu0 %v983
    %1513 = vmatpush1.bf16.msra.mxu0 %v982
    %1514 = vmatprep.subr.bf16.mxu0 %v987
    %1515 = vmatpush1.bf16.msra.mxu0 %v986
    %1516 = vmatprep.subr.bf16.mxu0 %v991
    %1517 = vmatpush1.bf16.msra.mxu0 %v990
    %1518 = vmatprep.subr.bf16.mxu0 %v995
    %1519 = vmatpush1.bf16.msra.mxu0 %v994
    %1520 = vmatprep.subr.bf16.mxu0 %v999
    %1521 = vmatpush1.bf16.msra.mxu0 %v998
    %1522 = vmatprep.subr.bf16.mxu0 %v1003
    %1523 = vmatpush1.bf16.msra.mxu0 %v1002
    %1524 = vmatprep.subr.bf16.mxu0 %v1007
    %1525 = vmatpush1.bf16.msra.mxu0 %v1006
    %1526 = vmatprep.subr.bf16.mxu0 %v1011
    %1527 = vmatpush1.bf16.msra.mxu0 %v1010
    %1528 = vmatprep.subr.bf16.mxu0 %v1015
    %1529 = vmatpush1.bf16.msra.mxu0 %v1014
    %1530 = vmatprep.subr.bf16.mxu0 %v1019
    %1531 = vmatpush1.bf16.msra.mxu0 %v1018
    %1532 = vmatprep.subr.bf16.mxu0 %v1023
    %1533 = vmatpush1.bf16.msra.mxu0 %v1022
    %1534 = vmatprep.subr.bf16.mxu0 %v1027
    %1535 = vmatpush1.bf16.msra.mxu0 %v1026
    %1536 = vmatprep.subr.bf16.mxu0 %v1031
    %1537 = vmatpush1.bf16.msra.mxu0 %v1030
    %1538 = vmatprep.subr.bf16.mxu0 %v1035
    %1539 = vmatpush1.bf16.msra.mxu0 %v1034
    %1540 = vmatprep.subr.bf16.mxu0 %v1039
    %1541 = vmatpush1.bf16.msra.mxu0 %v1038
    %1542 = vmatprep.subr.bf16.mxu0 %v1043
    %1543 = vmatpush1.bf16.msra.mxu0 %v1042
    %1544 = vmatprep.mubr.bf16.mxu0 %v319
    %1545 = vmatmul.mubr.bf16.gmra.mrb[0].mxu0 %v318
    %v1546 = vpop.f32.mrb[0].mxu0
    %v1547 = vadd.f32 %v1494, %v1546
    %v1548 = vpop.f32.mrb[0].mxu0
    %v1549 = vadd.f32 %v1496, %v1548
    %v1550 = vpop.f32.mrb[0].mxu0
    %v1551 = vadd.f32 %v1498, %v1550
    %v1552 = vpop.f32.mrb[0].mxu0
    %v1553 = vadd.f32 %v1500, %v1552
    %1554 = vmatprep.mubr.bf16.mxu0 %v325
    %1555 = vmatmul.mubr.bf16.gmra.mrb[0].mxu0 %v324
    %v1556 = vpop.f32.mrb[0].mxu0
    %v1557 = vadd.f32 %v1504, %v1556
    %v1558 = vpop.f32.mrb[0].mxu0
    %v1559 = vadd.f32 %v1506, %v1558
    %v1560 = vpop.f32.mrb[0].mxu0
    %v1561 = vadd.f32 %v1508, %v1560
    %v1562 = vpop.f32.mrb[0].mxu0
    %v1563 = vadd.f32 %v1510, %v1562
    %1564 = vdwg.mxu0
    %1565 = vmatprep.subr.bf16.mxu0 %v1047
    %1566 = vmatpush1.bf16.msra.mxu0 %v1046
    %1567 = vmatprep.subr.bf16.mxu0 %v1051
    %1568 = vmatpush1.bf16.msra.mxu0 %v1050
    %1569 = vmatprep.subr.bf16.mxu0 %v1055
    %1570 = vmatpush1.bf16.msra.mxu0 %v1054
    %1571 = vmatprep.subr.bf16.mxu0 %v1059
    %1572 = vmatpush1.bf16.msra.mxu0 %v1058
    %1573 = vmatprep.subr.bf16.mxu0 %v1063
    %1574 = vmatpush1.bf16.msra.mxu0 %v1062
    %1575 = vmatprep.subr.bf16.mxu0 %v1067
    %1576 = vmatpush1.bf16.msra.mxu0 %v1066
    %1577 = vmatprep.subr.bf16.mxu0 %v1071
    %1578 = vmatpush1.bf16.msra.mxu0 %v1070
    %1579 = vmatprep.subr.bf16.mxu0 %v1075
    %1580 = vmatpush1.bf16.msra.mxu0 %v1074
    %1581 = vmatprep.subr.bf16.mxu0 %v1079
    %1582 = vmatpush1.bf16.msra.mxu0 %v1078
    %1583 = vmatprep.subr.bf16.mxu0 %v1083
    %1584 = vmatpush1.bf16.msra.mxu0 %v1082
    %1585 = vmatprep.subr.bf16.mxu0 %v1087
    %1586 = vmatpush1.bf16.msra.mxu0 %v1086
    %1587 = vmatprep.subr.bf16.mxu0 %v1091
    %1588 = vmatpush1.bf16.msra.mxu0 %v1090
    %1589 = vmatprep.subr.bf16.mxu0 %v1095
    %1590 = vmatpush1.bf16.msra.mxu0 %v1094
    %1591 = vmatprep.subr.bf16.mxu0 %v1099
    %1592 = vmatpush1.bf16.msra.mxu0 %v1098
    %1593 = vmatprep.subr.bf16.mxu0 %v1103
    %1594 = vmatpush1.bf16.msra.mxu0 %v1102
    %1595 = vmatprep.subr.bf16.mxu0 %v1107
    %1596 = vmatpush1.bf16.msra.mxu0 %v1106
    %1597 = vmatprep.mubr.bf16.mxu0 %v321
    %1598 = vmatmul.mubr.bf16.gmra.mrb[0].mxu0 %v320
    %v1599 = vpop.f32.mrb[0].mxu0
    %v1600 = vadd.f32 %v1547, %v1599
    %v1601 = vpop.f32.mrb[0].mxu0
    %v1602 = vadd.f32 %v1549, %v1601
    %v1603 = vpop.f32.mrb[0].mxu0
    %v1604 = vadd.f32 %v1551, %v1603
    %v1605 = vpop.f32.mrb[0].mxu0
    %v1606 = vadd.f32 %v1553, %v1605
    %1607 = vmatprep.mubr.bf16.mxu0 %v327
    %1608 = vmatmul.mubr.bf16.gmra.mrb[0].mxu0 %v326
    %v1609 = vpop.f32.mrb[0].mxu0
    %v1610 = vadd.f32 %v1557, %v1609
    %v1611 = vpop.f32.mrb[0].mxu0
    %v1612 = vadd.f32 %v1559, %v1611
    %v1613 = vpop.f32.mrb[0].mxu0
    %v1614 = vadd.f32 %v1561, %v1613
    %v1615 = vpop.f32.mrb[0].mxu0
    %v1616 = vadd.f32 %v1563, %v1615
    %1617 = vdwg.mxu0
    %1619 = vset.pattern.permute.xlu0 0
    %1620 = vperm.xlu0 %1619, %v254
    %v1621 = vpop.permute.xlu0 %1620
    %1624 = vset.pattern.permute.xlu0 0
    %1625 = vperm.xlu0 %1624, %v255
    %v1626 = vpop.permute.xlu0 %1625
    %1629 = vset.pattern.permute.xlu0 0
    %1630 = vperm.xlu0 %1629, %v256
    %v1631 = vpop.permute.xlu0 %1630
    %1634 = vset.pattern.permute.xlu0 0
    %1635 = vperm.xlu0 %1634, %v257
    %v1636 = vpop.permute.xlu0 %1635
    %v1638 = vmul.f32 %v1441, %v1621
    %v1639 = vmul.f32 %v1443, %v1621
    %v1640 = vmul.f32 %v1600, %v1621
    %v1641 = vmul.f32 %v1602, %v1621
    %v1642 = vmul.f32 %v1445, %v1626
    %v1643 = vmul.f32 %v1447, %v1626
    %v1644 = vmul.f32 %v1604, %v1626
    %v1645 = vmul.f32 %v1606, %v1626
    %v1646 = vmul.f32 %v1451, %v1631
    %v1647 = vmul.f32 %v1453, %v1631
    %v1648 = vmul.f32 %v1610, %v1631
    %v1649 = vmul.f32 %v1612, %v1631
    %v1650 = vmul.f32 %v1455, %v1636
    %v1651 = vmul.f32 %v1457, %v1636
    %v1652 = vmul.f32 %v1614, %v1636
    %v1653 = vmul.f32 %v1616, %v1636
    %1654 = vst [vmem:[#allocation7] sm:$0xff] %v1638
    %1655 = vst [vmem:[#allocation7 + $0x8] sm:$0xff] %v1639
    %1656 = vst [vmem:[#allocation7 + $0x10] sm:$0xff] %v1640
    %1657 = vst [vmem:[#allocation7 + $0x18] sm:$0xff] %v1641
    %1658 = vst [vmem:[#allocation7 + $0x20] sm:$0xff] %v1642
    %1659 = vst [vmem:[#allocation7 + $0x28] sm:$0xff] %v1643
    %1660 = vst [vmem:[#allocation7 + $0x30] sm:$0xff] %v1644
    %1661 = vst [vmem:[#allocation7 + $0x38] sm:$0xff] %v1645
    %1662 = vst [vmem:[#allocation7 + $0x40] sm:$0xff] %v1646
    %1663 = vst [vmem:[#allocation7 + $0x48] sm:$0xff] %v1647
    %1664 = vst [vmem:[#allocation7 + $0x50] sm:$0xff] %v1648
    %1665 = vst [vmem:[#allocation7 + $0x58] sm:$0xff] %v1649
    %1666 = vst [vmem:[#allocation7 + $0x60] sm:$0xff] %v1650
    %1667 = vst [vmem:[#allocation7 + $0x68] sm:$0xff] %v1651
    %1668 = vst [vmem:[#allocation7 + $0x70] sm:$0xff] %v1652
    %1669 = vst [vmem:[#allocation7 + $0x78] sm:$0xff] %v1653
    // Predicated region
    $region26: #{tpu_custom_call.1} parent=1 // pred_check
      _
    $region27: #{tpu_custom_call.1} parent=1 // pred_check_branch
      %1671 = sbr.rel (0) target = $region29
    $region28: #{tpu_custom_call.1} parent=1 // pred_region
      %s1673 = ssub.s32 2048, 2048
      %1674 = vsyncadd [#allocation4], %s1673
      %s1675 = sshll.u32 [#allocation7], 4
      %s1676 = int_to_ptr.vmem [resolvable:$true] %s1675
      %1681 = dma.vmem_to_hbm [thread:$0]  %s1676, 2048, %s4, [#allocation4], 512, 512, 32
    $region29: #{tpu_custom_call.1} parent=1 // pred_fallthru
      _
    // Predicated region
    $region30: #{tpu_custom_call.1} parent=1 // pred_check
      _
    $region31: #{tpu_custom_call.1} parent=1 // pred_check_branch
      %1683 = sbr.rel (0) target = $region33
    $region32: #{tpu_custom_call.1} parent=1 // pred_region
      %1684 = dma.done [#allocation4], 2048
    $region33: #{tpu_custom_call.1} parent=1 // pred_fallthru
      _
    %1685 = vsyncpa [#allocation3], 1
    %1686 = vsyncpa [#allocation6], 1
    %1687 = vsyncpa [#allocation4], 1

</llo_original>
